<compile_context>
chip_gen: v6e
topology: v6e:2x2x1
jax: 0.10.0
libtpu: 0.0.40
codegen_flags: <defaults>
</compile_context>

<pallas_src>
from typing import NamedTuple

import jax
import jax.numpy as jnp
import numpy as np
from jax.experimental import pallas as pl
from jax.experimental.pallas import tpu as pltpu

LANE = 128


# ---------------------------------------------------------------------------
# Small helpers
# ---------------------------------------------------------------------------
def _round_up(x, m):
    return (x + m - 1) // m * m


def _pad_to(x, shape):
    pads = [(0, t - s) for s, t in zip(x.shape, shape)]
    if not any(p for _, p in pads):
        return x
    return jnp.pad(x, pads)


def _vmem_capacity_bytes():
    """Physical VMEM per core (v5e/v6e: 128 MiB, v7x: 64 MiB)."""
    try:
        return int(pltpu.get_tpu_info().vmem_capacity_bytes)
    except Exception:
        return 64 << 20  # conservative (v7x per-core VMEM)


def _working_set_bytes(tm, n_pad, d_pad, c_pad):
    """Full per-layer VMEM working set (dense layer is the worst case)."""
    a_stream = 2 * tm * n_pad * 2        # bf16 A row tile, double-buffered
    x_block = 1 * n_pad * d_pad * 2      # bf16 X, single-buffered (invariant)
    w_dense = 2 * d_pad * c_pad * 2      # bf16 W[r], double-buffered over r
    w_diag = 2 * d_pad * 4               # f32 diag weights, double-buffered
    bias = 1 * c_pad * 4                 # f32 bias, single-buffered
    acc = tm * max(d_pad, c_pad) * 4     # f32 accumulator scratch
    out = 2 * tm * c_pad * 4             # f32 dense output tile, double-buffered
    return a_stream + x_block + w_dense + w_diag + bias + acc + out


class TilingPlan(NamedTuple):
    num_nodes: int
    n_pad: int
    d_pad: int
    c_pad: int
    tm: int
    vmem_limit_bytes: int


def plan_tiling(num_nodes, nemb, nclass, *, vmem_bytes=None):
    """Pick row tile TM / padded sizes from the actual VMEM capacity.

    TM steps in multiples of 16 (bf16 sublane packing) and is budgeted against
    the FULL working set, not just the A stream.  On large-VMEM parts
    (v5e/v6e, 128 MiB) this keeps TM at 256-512 for large N; on v7x (64 MiB)
    it backs off automatically.  For small graphs TM is capped near N/2 so the
    "parallel" row axis has >= 2 tiles (feeds both v7x TensorCores).
    """
    d_pad = _round_up(max(nemb, 1), LANE)
    c_pad = _round_up(max(nclass, 1), LANE)
    if vmem_bytes is None:
        vmem_bytes = _vmem_capacity_bytes()
    budget = int(vmem_bytes * 0.7)  # headroom for compiler-internal scratch

    max_tm = max(16, _round_up((num_nodes + 1) // 2, 16))  # >= 2 row tiles
    tm = 16
    for cand in (512, 384, 256, 128, 64, 32, 16):
        if cand > max_tm:
            continue
        n_pad_c = _round_up(num_nodes, cand)
        if _working_set_bytes(cand, n_pad_c, d_pad, c_pad) <= budget:
            tm = cand
            break
    n_pad = _round_up(num_nodes, tm)
    ws = _working_set_bytes(tm, n_pad, d_pad, c_pad)
    vmem_limit = min(int(vmem_bytes * 0.95), max(ws + ws // 4, 32 << 20))
    return TilingPlan(num_nodes, n_pad, d_pad, c_pad, tm, int(vmem_limit))


# ---------------------------------------------------------------------------
# Graph preprocessing glue (mirrors torch_rgcn utils; plain JAX, not hot path)
# ---------------------------------------------------------------------------
def add_inverse_and_self(triples, num_nodes, num_rels):
    """[triples ; inverse triples (p + nrel) ; self loops (p = 2*nrel)]."""
    inv = jnp.stack([triples[:, 2], triples[:, 1] + num_rels, triples[:, 0]], axis=1)
    idx = jnp.arange(num_nodes, dtype=triples.dtype)
    self_loops = jnp.stack(
        [idx, jnp.full((num_nodes,), 2 * num_rels, dtype=triples.dtype), idx], axis=1
    )
    return jnp.concatenate([triples, inv, self_loops], axis=0)


def build_normalized_adjacency(triples_plus, num_nodes, num_rels_total,
                               num_orig_edges, *, n_pad=None,
                               dtype=jnp.bfloat16):
    """Dense (R, Np, Np) version of the horizontally-stacked, column-normalized
    sparse adjacency used by RelationalGraphConvolutionNC(vertical_stacking=False).

    Built directly in the kernel operand dtype (bf16) and at the padded node
    count, so the forward pass never re-casts or re-pads the big A stream.
    Zero padding rows/columns does not change the math.
    """
    s = triples_plus[:, 0]
    p = triples_plus[:, 1]
    o = triples_plus[:, 2]
    N, R = num_nodes, num_rels_total
    Np = N if n_pad is None else n_pad

    # sum_sparse(..., row_normalisation=False): per-edge column sums of the
    # horizontally stacked adjacency (column index = p*N + o).
    col = p * N + o
    col_sums = jnp.zeros((R * N,), jnp.float32).at[col].add(1.0)
    sums = col_sums[col]

    # "Rearrange column-wise normalised value to reflect original order
    #  (because of transpose-trick)": swap sums of original and inverse edges.
    E = num_orig_edges
    sums = jnp.concatenate([sums[E:2 * E], sums[:E], sums[2 * E:]], axis=0)

    vals = 1.0 / sums
    A = jnp.zeros((R, Np, Np), jnp.float32).at[p, s, o].add(vals)
    return A.astype(dtype)


# ---------------------------------------------------------------------------
# Pallas kernels
# ---------------------------------------------------------------------------
def _rgcn_diag_kernel(a_ref, x_ref, w_ref, out_ref, acc_ref):
    """Diagonal-weight R-GCN + fused ReLU.

    out[m, d] = relu( sum_r w[r, d] * (A[r] @ X)[m, d] )

    a_ref: (TM, Np) bf16   x_ref: (Np, Dp) bf16   w_ref: (1, Dp) f32
    out_ref: (TM, Dp) bf16   acc_ref: (TM, Dp) f32 scratch
    """
    r = pl.program_id(1)

    @pl.when(r == 0)
    def _init():
        acc_ref[...] = jnp.zeros_like(acc_ref)

    msg = jnp.dot(a_ref[...], x_ref[...], preferred_element_type=jnp.float32)
    acc_ref[...] += msg * w_ref[...]            # (1, Dp) broadcast over rows

    @pl.when(r == pl.num_programs(1) - 1)
    def _finalize():
        # ReLU between the two layers applied exactly once, here.
        out_ref[...] = jnp.maximum(acc_ref[...], 0.0).astype(out_ref.dtype)


def _rgcn_dense_kernel(a_ref, x_ref, w_ref, b_ref, out_ref, acc_ref):
    """Full-weight R-GCN: out = sum_r (A[r] @ X) @ W[r] + bias.

    (A@X)@W order: no per-(row-tile, relation) recompute of X@W; the side
    matmul is only (TM, Dp) x (Dp, Cp).

    a_ref: (TM, Np) bf16   x_ref: (Np, Dp) bf16   w_ref: (Dp, Cp) bf16
    b_ref: (1, Cp) f32    out_ref: (TM, Cp) f32   acc_ref: (TM, Cp) f32 scratch
    """
    r = pl.program_id(1)

    @pl.when(r == 0)
    def _init():
        acc_ref[...] = jnp.zeros_like(acc_ref)

    msg = jnp.dot(a_ref[...], x_ref[...], preferred_element_type=jnp.float32)
    acc_ref[...] += jnp.dot(msg.astype(jnp.bfloat16), w_ref[...],
                            preferred_element_type=jnp.float32)

    @pl.when(r == pl.num_programs(1) - 1)
    def _finalize():
        out_ref[...] = (acc_ref[...] + b_ref[...]).astype(out_ref.dtype)


# ---------------------------------------------------------------------------
# Layer wrappers (inputs already padded to LANE / TM multiples and cast)
# ---------------------------------------------------------------------------
def rgcn_diag_layer(a_bf16, x_bf16, w_diag_f32, *, tm, vmem_limit_bytes):
    R, Np, _ = a_bf16.shape
    Dp = x_bf16.shape[1]
    w3 = w_diag_f32.reshape(R, 1, Dp)

    grid_spec = pltpu.PrefetchScalarGridSpec(
        num_scalar_prefetch=0,
        grid=(Np // tm, R),
        in_specs=[
            pl.BlockSpec((pl.Squeezed(), tm, Np), lambda i, r: (r, i, 0)),
            # Grid-invariant X: single-buffered (saves Np*Dp*2 bytes of VMEM).
            pl.BlockSpec((Np, Dp), lambda i, r: (0, 0),
                         pipeline_mode=pl.Buffered(buffer_count=1)),
            pl.BlockSpec((pl.Squeezed(), 1, Dp), lambda i, r: (r, 0, 0)),
        ],
        out_specs=pl.BlockSpec((tm, Dp), lambda i, r: (i, 0)),
        scratch_shapes=[pltpu.VMEM((tm, Dp), jnp.float32)],
    )
    return pl.pallas_call(
        _rgcn_diag_kernel,
        out_shape=jax.ShapeDtypeStruct((Np, Dp), jnp.bfloat16),
        grid_spec=grid_spec,
        compiler_params=pltpu.CompilerParams(
            dimension_semantics=("parallel", "arbitrary"),
            vmem_limit_bytes=vmem_limit_bytes),
    )(a_bf16, x_bf16, w3)


def rgcn_dense_layer(a_bf16, x_bf16, w_bf16, b_f32, *, tm, vmem_limit_bytes):
    R, Np, _ = a_bf16.shape
    Dp = x_bf16.shape[1]
    Cp = w_bf16.shape[2]

    grid_spec = pltpu.PrefetchScalarGridSpec(
        num_scalar_prefetch=0,
        grid=(Np // tm, R),
        in_specs=[
            pl.BlockSpec((pl.Squeezed(), tm, Np), lambda i, r: (r, i, 0)),
            pl.BlockSpec((Np, Dp), lambda i, r: (0, 0),
                         pipeline_mode=pl.Buffered(buffer_count=1)),
            pl.BlockSpec((pl.Squeezed(), Dp, Cp), lambda i, r: (r, 0, 0)),
            pl.BlockSpec((1, Cp), lambda i, r: (0, 0),
                         pipeline_mode=pl.Buffered(buffer_count=1)),
        ],
        out_specs=pl.BlockSpec((tm, Cp), lambda i, r: (i, 0)),
        scratch_shapes=[pltpu.VMEM((tm, Cp), jnp.float32)],
    )
    return pl.pallas_call(
        _rgcn_dense_kernel,
        out_shape=jax.ShapeDtypeStruct((Np, Cp), jnp.float32),
        grid_spec=grid_spec,
        compiler_params=pltpu.CompilerParams(
            dimension_semantics=("parallel", "arbitrary"),
            vmem_limit_bytes=vmem_limit_bytes),
    )(a_bf16, x_bf16, w_bf16, b_f32)


# ---------------------------------------------------------------------------
# Full forward pass
# ---------------------------------------------------------------------------
def embedding_node_classifier_forward(plan, a_bf16, node_embeddings, w_diag,
                                      W1, b1):
    """Forward of EmbeddingNodeClassifier.

    `a_bf16` must be the pre-built bf16 adjacency at plan.n_pad nodes (see
    build_normalized_adjacency) -- it is NOT re-cast or re-padded here.
    """
    R, Np, _ = a_bf16.shape
    N, D = node_embeddings.shape
    C = W1.shape[2]
    assert Np == plan.n_pad and N == plan.num_nodes
    if a_bf16.dtype != jnp.bfloat16:      # safety net; expected path is a no-op
        a_bf16 = a_bf16.astype(jnp.bfloat16)

    # bf16 matmul operands (f32 accumulation inside the kernels); feature dims
    # zero-padded to 128 lanes so stores are unmasked and lane-dense; node rows
    # zero-padded to a multiple of the row tile.  Zero padding is math-neutral.
    x16 = _pad_to(node_embeddings, (Np, plan.d_pad)).astype(jnp.bfloat16)
    wd = _pad_to(w_diag, (R, plan.d_pad)).astype(jnp.float32)
    w1p = _pad_to(W1, (R, plan.d_pad, plan.c_pad)).astype(jnp.bfloat16)
    b1p = _pad_to(b1.reshape(1, C), (1, plan.c_pad)).astype(jnp.float32)

    # rgcn_no_hidden + fused ReLU -> (Np, Dp) bf16
    h = rgcn_diag_layer(a_bf16, x16, wd, tm=plan.tm,
                        vmem_limit_bytes=plan.vmem_limit_bytes)
    # rgc1 (+ bias) -> (Np, Cp) f32
    out = rgcn_dense_layer(a_bf16, h, w1p, b1p, tm=plan.tm,
                           vmem_limit_bytes=plan.vmem_limit_bytes)
    return out[:N, :C]


# ---------------------------------------------------------------------------
if __name__ == "__main__":
    key = jax.random.PRNGKey(0)
    N, nrel, nemb, nclass, E = 32, 3, 16, 8, 40
    R = 2 * nrel + 1  # relations + inverses + self-loop relation

    ks = jax.random.split(key, 6)
    s = jax.random.randint(ks[0], (E,), 0, N, dtype=jnp.int32)
    p = jax.random.randint(ks[1], (E,), 0, nrel, dtype=jnp.int32)
    o = jax.random.randint(ks[2], (E,), 0, N, dtype=jnp.int32)
    triples = jnp.stack([s, p, o], axis=1)

    plan = plan_tiling(N, nemb, nclass)
    triples_plus = add_inverse_and_self(triples, N, nrel)
    # Adjacency built once, in bf16, at the padded node count (preprocessing).
    A16 = build_normalized_adjacency(triples_plus, N, R, E, n_pad=plan.n_pad)

    # Deterministic synthetic parameter init (shapes per module __init__).
    # node_embeddings: kaiming_normal_, fan_in = nemb
    emb = jax.random.normal(ks[3], (N, nemb), jnp.float32) * jnp.sqrt(2.0 / nemb)
    # rgcn_no_hidden diagonal weights: (num_relations, nemb), no bias
    w_diag = jax.random.normal(ks[4], (R, nemb), jnp.float32) * (1.0 / jnp.sqrt(nemb))
    # rgc1 weights: (num_relations, nemb, nclass) glorot-uniform + zero bias
    limit = float(np.sqrt(6.0 / (nemb + nclass)))
    W1 = jax.random.uniform(ks[5], (R, nemb, nclass), jnp.float32, -limit, limit)
    b1 = jnp.zeros((nclass,), jnp.float32)

    out = embedding_node_classifier_forward(plan, A16, emb, w_diag, W1, b1)
    out = jax.block_until_ready(out)

    # Pure-JAX reference of the same forward pass.  All kernel-side bf16
    # roundings (A, X, W1, the stored activation h, and the A@X intermediate
    # of the dense layer) are modeled so the comparison is tight.
    f32 = lambda v: v.astype(jnp.bfloat16).astype(jnp.float32)
    A_r = A16[:, :N, :N].astype(jnp.float32)       # already bf16-valued
    emb_r = f32(emb)
    W1_r = f32(W1)
    h_ref = jnp.einsum("rmo,od,rd->md", A_r, emb_r, w_diag)
    h_ref = jnp.maximum(h_ref, 0.0)
    h16 = f32(h_ref)                               # kernel stores h in bf16
    msg = jnp.einsum("rmo,od->rmd", A_r, h16)      # f32 accumulation
    out_ref = jnp.einsum("rmd,rdc->mc", f32(msg), W1_r) + b1
    np.testing.assert_allclose(np.asarray(out), np.asarray(out_ref),
                               rtol=2e-2, atol=2e-2)

    print("KERNEL_OK")
</pallas_src>

<mosaic_0001>
module attributes {stable_mosaic.version = 11 : i64} {
  func.func @_rgcn_diag_kernel(%arg0: i32, %arg1: i32, %arg2: memref<1x16x32xbf16, #tpu.memory_space<vmem>>, %arg3: memref<32x128xbf16, #tpu.memory_space<vmem>>, %arg4: memref<1x1x128xf32, #tpu.memory_space<vmem>>, %arg5: memref<16x128xbf16, #tpu.memory_space<vmem>>, %arg6: memref<16x128xf32, #tpu.memory_space<vmem>>) attributes {dimension_semantics = [#tpu.dimension_semantics<parallel>, #tpu.dimension_semantics<arbitrary>], iteration_bounds = array<i64: 2, 7>, scalar_prefetch = 0 : i64, scratch_operands = 1 : i64, tpu.core_type = #tpu.core_type<tc>, window_params = [{transform_indices = @transform_0, window_bounds = array<i64: 1, 16, 32>}, {pipeline_mode = #tpu.pipeline_mode<synchronous>, transform_indices = @transform_1, window_bounds = array<i64: 32, 128>}, {transform_indices = @transform_2, window_bounds = array<i64: 1, 1, 128>}, {transform_indices = @transform_3, window_bounds = array<i64: 16, 128>}]} {
    %c0_i32 = arith.constant 0 : i32
    %0 = arith.cmpi eq, %arg1, %c0_i32 : i32
    %1 = arith.extui %0 : i1 to i32
    %c0_i32_0 = arith.constant 0 : i32
    %2 = arith.cmpi ne, %1, %c0_i32_0 : i32
    scf.if %2 {
      %cst_13 = arith.constant 0.000000e+00 : f32
      %17 = vector.broadcast %cst_13 : f32 to vector<16x128xf32>
      %c0_14 = arith.constant 0 : index
      %c0_15 = arith.constant 0 : index
      %18 = vector.load %arg6[%c0_14, %c0_15] : memref<16x128xf32, #tpu.memory_space<vmem>>, vector<16x128xf32>
      tpu.vector_store %arg6[%c0_14, %c0_15], %17 {strides = array<i32>} : memref<16x128xf32, #tpu.memory_space<vmem>>, vector<16x128xf32>,
    } else {
    }
    %c0 = arith.constant 0 : index
    %c0_1 = arith.constant 0 : index
    %c0_2 = arith.constant 0 : index
    %3 = vector.load %arg2[%c0, %c0_1, %c0_2] : memref<1x16x32xbf16, #tpu.memory_space<vmem>>, vector<1x16x32xbf16>
    %4 = vector.shape_cast %3 : vector<1x16x32xbf16> to vector<16x32xbf16>
    %c0_3 = arith.constant 0 : index
    %c0_4 = arith.constant 0 : index
    %5 = vector.load %arg3[%c0_3, %c0_4] : memref<32x128xbf16, #tpu.memory_space<vmem>>, vector<32x128xbf16>
    %cst = arith.constant dense<0.000000e+00> : vector<16x128xf32>
    %6 = tpu.matmul %4, %5, %cst {dimension_numbers = #tpu.dot_dimension_numbers<[1], [0], [0], [1], [0, 0, 1, 1], [], []>} : vector<16x32xbf16>, vector<32x128xbf16>, vector<16x128xf32> -> vector<16x128xf32>
    %c0_5 = arith.constant 0 : index
    %c0_6 = arith.constant 0 : index
    %7 = vector.load %arg6[%c0_5, %c0_6] : memref<16x128xf32, #tpu.memory_space<vmem>>, vector<16x128xf32>
    %c0_7 = arith.constant 0 : index
    %c0_8 = arith.constant 0 : index
    %c0_9 = arith.constant 0 : index
    %8 = vector.load %arg4[%c0_7, %c0_8, %c0_9] : memref<1x1x128xf32, #tpu.memory_space<vmem>>, vector<1x1x128xf32>
    %9 = vector.shape_cast %8 : vector<1x1x128xf32> to vector<1x128xf32>
    %10 = vector.broadcast %9 : vector<1x128xf32> to vector<16x128xf32>
    %11 = arith.mulf %6, %10 : vector<16x128xf32>
    %12 = arith.addf %7, %11 : vector<16x128xf32>
    %c0_10 = arith.constant 0 : index
    %c0_11 = arith.constant 0 : index
    %13 = vector.load %arg6[%c0_10, %c0_11] : memref<16x128xf32, #tpu.memory_space<vmem>>, vector<16x128xf32>
    tpu.vector_store %arg6[%c0_10, %c0_11], %12 {strides = array<i32>} : memref<16x128xf32, #tpu.memory_space<vmem>>, vector<16x128xf32>,
    %c6_i32 = arith.constant 6 : i32
    %14 = arith.cmpi eq, %arg1, %c6_i32 : i32
    %15 = arith.extui %14 : i1 to i32
    %c0_i32_12 = arith.constant 0 : i32
    %16 = arith.cmpi ne, %15, %c0_i32_12 : i32
    scf.if %16 {
      %c0_13 = arith.constant 0 : index
      %c0_14 = arith.constant 0 : index
      %17 = vector.load %arg6[%c0_13, %c0_14] : memref<16x128xf32, #tpu.memory_space<vmem>>, vector<16x128xf32>
      %cst_15 = arith.constant 0.000000e+00 : f32
      %18 = vector.broadcast %cst_15 : f32 to vector<16x128xf32>
      %19 = arith.maximumf %17, %18 : vector<16x128xf32>
      %20 = arith.truncf %19 : vector<16x128xf32> to vector<16x128xbf16>
      %c0_16 = arith.constant 0 : index
      %c0_17 = arith.constant 0 : index
      %21 = vector.load %arg5[%c0_16, %c0_17] : memref<16x128xbf16, #tpu.memory_space<vmem>>, vector<16x128xbf16>
      tpu.vector_store %arg5[%c0_16, %c0_17], %20 {strides = array<i32>} : memref<16x128xbf16, #tpu.memory_space<vmem>>, vector<16x128xbf16>,
    } else {
    }
    return
  }
  func.func @transform_0(%arg0: i32, %arg1: i32) -> (i32, i32, i32) {
    %c0_i32 = arith.constant 0 : i32
    %c0_i32_0 = arith.constant 0 : i32
    return %arg1, %arg0, %c0_i32 : i32, i32, i32
  }
  func.func @transform_1(%arg0: i32, %arg1: i32) -> (i32, i32) {
    %c0_i32 = arith.constant 0 : i32
    %c0_i32_0 = arith.constant 0 : i32
    %c0_i32_1 = arith.constant 0 : i32
    return %c0_i32, %c0_i32_0 : i32, i32
  }
  func.func @transform_2(%arg0: i32, %arg1: i32) -> (i32, i32, i32) {
    %c0_i32 = arith.constant 0 : i32
    %c0_i32_0 = arith.constant 0 : i32
    %c0_i32_1 = arith.constant 0 : i32
    return %arg1, %c0_i32, %c0_i32_0 : i32, i32, i32
  }
  func.func @transform_3(%arg0: i32, %arg1: i32) -> (i32, i32) {
    %c0_i32 = arith.constant 0 : i32
    %c0_i32_0 = arith.constant 0 : i32
    return %arg0, %c0_i32 : i32, i32
  }
}

</mosaic_0001>

<llo_original>
// kernel: tpu_custom_call.1
$region0: #{tpu_custom_call.1}
  #allocation0 [shape = 'u32[]', space=smem, size = 0x4, offset = 0x4, fixed_abs, tag = 'smem constant byte address 0x4 - core index']
  #allocation1 [shape = 'u32[144,128]{1,0:T(1,128)}', space=vmem, size = 0x12000, scoped, tag = 'internal scratch']
  #allocation2 [shape = 'f32[16,128]{1,0:T(8,128)}', space=vmem, size = 0x2000, scoped, tag = 'scratch operand']
  %s0 = inlined_call_operand.hbm [shape: bf16[7,32,32], index: 0, kind: input, shape index: {}]
  %s1 = inlined_call_operand.hbm [shape: bf16[32,128], index: 1, kind: input, shape index: {}]
  %s2 = inlined_call_operand.hbm [shape: f32[7,1,128], index: 2, kind: input, shape index: {}]
  %s3 = inlined_call_operand.hbm [shape: bf16[32,128], index: 3, kind: output, shape index: {}]
  %s4 = sld [smem:[#allocation0]]
  $region65: #{tpu_custom_call.1} parent=0
    _
  %s6 = ssub.s32 1, %s4
  %s7 = scalar_select 0, %s6, %s4
  $region1: #{tpu_custom_call.1} parent=0
    #allocation3 [shape = 'u8[8192]{0}', space=vmem, size = 0x2000, scoped, tag = 'input window, operand 0']
    #allocation4 [shape = 's32[2]{0}', space=sflag, size = 0x8, scoped, tag = 'scoped memory for tpu_custom_call.1']
    #allocation5 [shape = 's32[2]{0}', space=sflag, size = 0x8, scoped, tag = 'scoped memory for tpu_custom_call.1']
    #allocation6 [shape = 'u8[8192]{0}', space=vmem, size = 0x2000, scoped, tag = 'input window, operand 1, single buffered']
    #allocation7 [shape = 's32[1]{0}', space=sflag, size = 0x4, scoped, tag = 'scoped memory for tpu_custom_call.1']
    #allocation8 [shape = 'u8[1024]{0}', space=vmem, size = 0x400, scoped, tag = 'input window, operand 2']
    #allocation9 [shape = 'u8[8192]{0}', space=vmem, size = 0x2000, scoped, tag = 'output window, operand 0']
    %8 = vsyncpa [#allocation4], 0
    %s9 = scalar_lea.sflag [#allocation4], 1
    %10 = vsyncpa %s9, 0
    %11 = vsyncpa [#allocation7], 0
    %12 = vsyncpa [#allocation5], 0
    %s13 = scalar_lea.sflag [#allocation5], 1
    %14 = vsyncpa %s13, 0
    loop: start=0, step=1, limit=16
    $region2: #{tpu_custom_call.1} parent=1 // loop_pre_header
      _
    $region3: #{tpu_custom_call.1} parent=1 // loop_header
      %s16 = sphi 0, %s20
      %p17 = scmp.ge.s32.totalorder %s16, 16
      %s23 = sphi 0, %s35
      %s24 = sphi 0, %s31
      %s25 = sphi 0, %s23
      %s26 = sphi 0, %s24
      %s27 = sphi 0, %s25
      %s28 = sphi 0, %s26
      %s40 = sphi 0, %s42
      %s43 = sphi 0, %s40
      %s44 = sphi 0, %s43
      %s60 = sphi 0, %s44
      %s64 = sphi 0, %s64
      %s66 = sphi 0, %s64
      %s67 = sphi 0, %s66
      %s81 = sphi 0, %s67
      %s87 = sphi 0, %s89
      %s90 = sphi 0, %s87
      %s91 = sphi 0, %s90
      %s107 = sphi 0, %s91
      %s113 = sphi 0, %s115
      %s116 = sphi 0, %s113
      %s117 = sphi 0, %s116
      %s133 = sphi 0, %s117
    $region4: #{tpu_custom_call.1} parent=1 // loop_header_branch
      %19 = sbr.rel (%p17) target = $region8
    $region5: #{tpu_custom_call.1} parent=1 // loop_body
      %s21 = ssub.s32 %s16, 1
      %s22 = ssub.s32 %s16, 2
      %s29 = sadd.s32 1, %s24
      %p30 = scmp.ge.s32.totalorder %s29, 7
      %s31 = scalar_select %p30, 0, %s29
      %s32 = sadd.s32 1, %s23
      %s33 = scalar_select %p30, %s32, %s23
      %p34 = scmp.ge.s32.totalorder %s33, 2
      %s35 = scalar_select %p34, 0, %s33
      %s36 = ssub.s32 %s24, %s31
      %s37 = ssub.s32 %s23, %s35
      %s38 = sor.u32 %s36, %s37
      %p39 = scmp.eq.s32.totalorder %s38, 0
      %s41 = sadd.s32 %s40, 1
      %s42 = scalar_select %p39, %s40, %s41
      %p45 = pneg %p39
      %p46 = scmp.eq.s32.totalorder %s16, 13
      %p47 = por %p45, %p46
      %p48 = scmp.ne.s32.totalorder %s40, %s43
      %p49 = scmp.eq.s32.totalorder %s16, 0
      %p50 = por %p48, %p49
      %p51 = scmp.ne.s32.totalorder %s40, %s43
      %p52 = scmp.eq.s32.totalorder %s21, 13
      %p53 = por %p51, %p52
      %p54 = scmp.ne.s32.totalorder %s43, %s44
      %p55 = scmp.eq.s32.totalorder %s21, 0
      %p56 = por %p54, %p55
      %p57 = scmp.ne.s32.totalorder %s43, %s44
      %p58 = scmp.eq.s32.totalorder %s22, 13
      %p59 = por %p57, %p58
      %p61 = scmp.ne.s32.totalorder %s44, %s60
      %p62 = scmp.eq.s32.totalorder %s22, 0
      %p63 = por %p61, %p62
      %s65 = sadd.s32 %s64, 1
      %p68 = scmp.eq.s32.totalorder %s16, 13
      %p69 = scmp.ne.s32.totalorder %s64, %s66
      %p70 = scmp.eq.s32.totalorder %s16, 0
      %p71 = por %p69, %p70
      %p72 = scmp.ne.s32.totalorder %s64, %s66
      %p73 = scmp.eq.s32.totalorder %s21, 13
      %p74 = por %p72, %p73
      %p75 = scmp.ne.s32.totalorder %s66, %s67
      %p76 = scmp.eq.s32.totalorder %s21, 0
      %p77 = por %p75, %p76
      %p78 = scmp.ne.s32.totalorder %s66, %s67
      %p79 = scmp.eq.s32.totalorder %s22, 13
      %p80 = por %p78, %p79
      %p82 = scmp.ne.s32.totalorder %s67, %s81
      %p83 = scmp.eq.s32.totalorder %s22, 0
      %p84 = por %p82, %p83
      %s85 = ssub.s32 %s24, %s31
      %p86 = scmp.eq.s32.totalorder %s85, 0
      %s88 = sadd.s32 %s87, 1
      %s89 = scalar_select %p86, %s87, %s88
      %p92 = pneg %p86
      %p93 = scmp.eq.s32.totalorder %s16, 13
      %p94 = por %p92, %p93
      %p95 = scmp.ne.s32.totalorder %s87, %s90
      %p96 = scmp.eq.s32.totalorder %s16, 0
      %p97 = por %p95, %p96
      %p98 = scmp.ne.s32.totalorder %s87, %s90
      %p99 = scmp.eq.s32.totalorder %s21, 13
      %p100 = por %p98, %p99
      %p101 = scmp.ne.s32.totalorder %s90, %s91
      %p102 = scmp.eq.s32.totalorder %s21, 0
      %p103 = por %p101, %p102
      %p104 = scmp.ne.s32.totalorder %s90, %s91
      %p105 = scmp.eq.s32.totalorder %s22, 13
      %p106 = por %p104, %p105
      %p108 = scmp.ne.s32.totalorder %s91, %s107
      %p109 = scmp.eq.s32.totalorder %s22, 0
      %p110 = por %p108, %p109
      %s111 = ssub.s32 %s23, %s35
      %p112 = scmp.eq.s32.totalorder %s111, 0
      %s114 = sadd.s32 %s113, 1
      %s115 = scalar_select %p112, %s113, %s114
      %p118 = pneg %p112
      %p119 = scmp.eq.s32.totalorder %s16, 13
      %p120 = por %p118, %p119
      %p121 = scmp.ne.s32.totalorder %s113, %s116
      %p122 = scmp.eq.s32.totalorder %s16, 0
      %p123 = por %p121, %p122
      %p124 = scmp.ne.s32.totalorder %s113, %s116
      %p125 = scmp.eq.s32.totalorder %s21, 13
      %p126 = por %p124, %p125
      %p127 = scmp.ne.s32.totalorder %s116, %s117
      %p128 = scmp.eq.s32.totalorder %s21, 0
      %p129 = por %p127, %p128
      %p130 = scmp.ne.s32.totalorder %s116, %s117
      %p131 = scmp.eq.s32.totalorder %s22, 13
      %p132 = por %p130, %p131
      %p134 = scmp.ne.s32.totalorder %s117, %s133
      %p135 = scmp.eq.s32.totalorder %s22, 0
      %p136 = por %p134, %p135
      %p137 = scmp.le.s32.totalorder 1, %s16
      %p138 = scmp.lt.s32.totalorder %s16, 15
      %p139 = pnand %p137, %p138
      %p140 = pneg %p139
      // Predicated region
      $region9: #{tpu_custom_call.1} parent=5 // pred_check
        _
      $region10: #{tpu_custom_call.1} parent=5 // pred_check_branch
        %142 = sbr.rel (%p139) target = $region12
      $region11: #{tpu_custom_call.1} parent=5 // pred_region
        %s143 = ssub.s32 %s16, 1
        // Predicated region
        $region13: #{tpu_custom_call.1} parent=11 // pred_check
          %p144 = pneg %p77
        $region14: #{tpu_custom_call.1} parent=11 // pred_check_branch
          %146 = sbr.rel (%p144) target = $region16
        $region15: #{tpu_custom_call.1} parent=11 // pred_region
          %s148 = ssub.s32 256, 256
          %149 = vsyncadd [#allocation7], %s148
          %s150 = sshll.u32 [#allocation6], 4
          %s151 = int_to_ptr.vmem [resolvable:$true] %s150
          %156 = dma.hbm_to_vmem [thread:$0]  %s1, 256, %s151, [#allocation7], 64, 64, 4
        $region16: #{tpu_custom_call.1} parent=11 // pred_fallthru
          _
      $region12: #{tpu_custom_call.1} parent=5 // pred_fallthru
        _
      %p157 = scmp.lt.s32.totalorder %s16, 14
      // Predicated region
      $region17: #{tpu_custom_call.1} parent=5 // pred_check
        %p158 = pneg %p157
      $region18: #{tpu_custom_call.1} parent=5 // pred_check_branch
        %160 = sbr.rel (%p158) target = $region20
      $region19: #{tpu_custom_call.1} parent=5 // pred_region
        // Predicated region
        $region21: #{tpu_custom_call.1} parent=19 // pred_check
          %p161 = pneg %p50
        $region22: #{tpu_custom_call.1} parent=19 // pred_check_branch
          %163 = sbr.rel (%p161) target = $region24
        $region23: #{tpu_custom_call.1} parent=19 // pred_region
          %s164 = sand.u32 %s16, 1
          %s165 = scalar_lea.sflag [#allocation4], %s164
          %s166 = sand.u32 %s40, 1
          %s167 = smul.addr %s166, 8
          %s168 = scalar_lea.vmem [#allocation3], %s167
          %s169 = smul.u32 2, %s23
          %s171 = ssub.s32 128, 128
          %172 = vsyncadd %s165, %s171
          %s173 = smul.addr %s24, 4
          %s174 = sadd.s32 %s169, %s173
          %s175 = smul.addr %s174, 64
          %s176 = scalar_lea.hbm %s0, %s175
          %s177 = sshll.u32 %s168, 4
          %s178 = int_to_ptr.vmem [resolvable:$true] %s177
          %183 = dma.hbm_to_vmem [thread:$0]  %s176, 128, %s178, %s165, 64, 64, 4
        $region24: #{tpu_custom_call.1} parent=19 // pred_fallthru
          _
        // Predicated region
        $region25: #{tpu_custom_call.1} parent=19 // pred_check
          %p184 = pneg %p97
        $region26: #{tpu_custom_call.1} parent=19 // pred_check_branch
          %186 = sbr.rel (%p184) target = $region28
        $region27: #{tpu_custom_call.1} parent=19 // pred_region
          %s187 = sand.u32 %s16, 1
          %s188 = scalar_lea.sflag [#allocation4], %s187
          %s189 = sand.u32 %s87, 1
          %s190 = scalar_lea.vmem [#allocation8], %s189
          %s192 = ssub.s32 16, 16
          %193 = vsyncadd %s188, %s192
          %s194 = smul.addr %s24, 16
          %s195 = scalar_lea.hbm %s2, %s194
          %s197 = sshll.u32 %s190, 4
          %s198 = int_to_ptr.vmem [resolvable:$true] %s197
          %200 = dma.hbm_to_vmem [thread:$0]  %s195, 16, %s198, %s188
        $region28: #{tpu_custom_call.1} parent=19 // pred_fallthru
          _
      $region20: #{tpu_custom_call.1} parent=5 // pred_fallthru
        _
      %p201 = scmp.le.s32.totalorder 1, %s16
      %p202 = scmp.lt.s32.totalorder %s16, 15
      %p203 = pnand %p201, %p202
      %p204 = pneg %p203
      // Predicated region
      $region29: #{tpu_custom_call.1} parent=5 // pred_check
        _
      $region30: #{tpu_custom_call.1} parent=5 // pred_check_branch
        %206 = sbr.rel (%p203) target = $region32
      $region31: #{tpu_custom_call.1} parent=5 // pred_region
        %s207 = ssub.s32 %s16, 1
        %s208 = sand.u32 %s21, 1
        %s209 = scalar_lea.sflag [#allocation4], %s208
        %s210 = sand.u32 %s43, 1
        %s211 = smul.addr %s210, 8
        %s212 = scalar_lea.vmem [#allocation3], %s211
        // Predicated region
        $region33: #{tpu_custom_call.1} parent=31 // pred_check
          %p213 = pneg %p56
        $region34: #{tpu_custom_call.1} parent=31 // pred_check_branch
          %215 = sbr.rel (%p213) target = $region36
        $region35: #{tpu_custom_call.1} parent=31 // pred_region
          %216 = dma.done %s209, 128
        $region36: #{tpu_custom_call.1} parent=31 // pred_fallthru
          _
        // Predicated region
        $region37: #{tpu_custom_call.1} parent=31 // pred_check
          %p217 = pneg %p77
        $region38: #{tpu_custom_call.1} parent=31 // pred_check_branch
          %219 = sbr.rel (%p217) target = $region40
        $region39: #{tpu_custom_call.1} parent=31 // pred_region
          %220 = dma.done [#allocation7], 256
        $region40: #{tpu_custom_call.1} parent=31 // pred_fallthru
          _
        %s221 = sand.u32 %s21, 1
        %s222 = scalar_lea.sflag [#allocation4], %s221
        %s223 = sand.u32 %s90, 1
        %s224 = scalar_lea.vmem [#allocation8], %s223
        // Predicated region
        $region41: #{tpu_custom_call.1} parent=31 // pred_check
          %p225 = pneg %p103
        $region42: #{tpu_custom_call.1} parent=31 // pred_check_branch
          %227 = sbr.rel (%p225) target = $region44
        $region43: #{tpu_custom_call.1} parent=31 // pred_region
          %228 = dma.done %s222, 16
        $region44: #{tpu_custom_call.1} parent=31 // pred_fallthru
          _
        %s229 = sand.u32 %s21, 1
        %s230 = scalar_lea.sflag [#allocation4], %s229
        %s231 = sand.u32 %s43, 1
        %s232 = smul.addr %s231, 8
        %s233 = scalar_lea.vmem [#allocation3], %s232
        %p234 = pneg %p56
        %p235 = pneg %p53
        %p236 = pneg %p77
        %p237 = pneg %p74
        %s238 = sand.u32 %s21, 1
        %s239 = scalar_lea.sflag [#allocation4], %s238
        %s240 = sand.u32 %s90, 1
        %s241 = scalar_lea.vmem [#allocation8], %s240
        %p242 = pneg %p103
        %p243 = pneg %p100
        %p244 = pneg %p129
        %p245 = pneg %p126
        %s246 = sand.u32 %s116, 1
        %s247 = scalar_lea.sflag [#allocation5], %s246
        %s248 = sand.u32 %s116, 1
        %s249 = smul.addr %s248, 8
        %s250 = scalar_lea.vmem [#allocation9], %s249
        %s251 = smul.u32 2, %s25
        %s252 = smul.u32 2, %s25
        %p254 = scmp.eq.s32.totalorder %s26, 0
        // Predicated region
        $region45: #{tpu_custom_call.1} parent=31 // pred_check
          %p255 = pneg %p254
        $region46: #{tpu_custom_call.1} parent=31 // pred_check_branch
          %257 = sbr.rel (%p255) target = $region48
        $region47: #{tpu_custom_call.1} parent=31 // pred_region
          %258 = vst [vmem:[#allocation2] sm:$0xff] 0.0
          %259 = vst [vmem:[#allocation2 + $0x8] sm:$0xff] 0.0
        $region48: #{tpu_custom_call.1} parent=31 // pred_fallthru
          _
        %v260 = vld [vmem:[%s212] sm:$0xf]
        %v261 = vld [vmem:[%s212 + $0x4] sm:$0xf]
        %v262 = vld [vmem:[#allocation6] sm:$0xf]
        %v263 = vld [vmem:[#allocation6 + $0x4] sm:$0xf]
        %v264 = vld [vmem:[#allocation6 + $0x8] sm:$0xf]
        %v265 = vld [vmem:[#allocation6 + $0xc] sm:$0xf]
        %v268 = vunpack.c.l.b16 %v260
        %v269 = vunpack.c.l.b16 %v261
        %v270 = vpack.c.b16 %v269, %v268
        %v275 = vunpack.c.l.b16 %v262
        %v276 = vunpack.c.l.b16 %v263
        %v277 = vunpack.c.l.b16 %v264
        %v278 = vunpack.c.l.b16 %v265
        %v279 = vpack.c.b16 %v276, %v275
        %v280 = vpack.c.b16 %v278, %v277
        %vm283 = vcmask 261120
        %v285 = vsel %vm283, %v270, 0
        %287 = vmatprep.subr.bf16.mxu0 0
        %288 = vmatpush1.bf16.msra.mxu0 0
        %289 = vmatprep.subr.bf16.mxu0 0
        %290 = vmatpush1.bf16.msra.mxu0 0
        %291 = vmatprep.subr.bf16.mxu0 0
        %292 = vmatpush1.bf16.msra.mxu0 0
        %293 = vmatprep.subr.bf16.mxu0 0
        %294 = vmatpush1.bf16.msra.mxu0 0
        %295 = vmatprep.subr.bf16.mxu0 0
        %296 = vmatpush1.bf16.msra.mxu0 0
        %297 = vmatprep.subr.bf16.mxu0 0
        %298 = vmatpush1.bf16.msra.mxu0 0
        %299 = vmatprep.subr.bf16.mxu0 0
        %300 = vmatpush1.bf16.msra.mxu0 %v280
        %301 = vmatprep.subr.bf16.mxu0 0
        %302 = vmatpush1.bf16.msra.mxu0 %v279
        %303 = vmatprep.subr.bf16.mxu0 0
        %304 = vmatpush2.bf16.msra.mxu0 0
        %305 = vmatprep.subr.bf16.mxu0 0
        %306 = vmatpush2.bf16.msra.mxu0 0
        %307 = vmatprep.subr.bf16.mxu0 0
        %308 = vmatpush2.bf16.msra.mxu0 0
        %309 = vmatprep.subr.bf16.mxu0 0
        %310 = vmatpush2.bf16.msra.mxu0 0
        %311 = vmatprep.subr.bf16.mxu0 0
        %312 = vmatpush2.bf16.msra.mxu0 0
        %313 = vmatprep.subr.bf16.mxu0 0
        %314 = vmatpush2.bf16.msra.mxu0 0
        %315 = vmatprep.subr.bf16.mxu0 0
        %316 = vmatpush2.bf16.msra.mxu0 0
        %317 = vmatprep.subr.bf16.mxu0 0
        %318 = vmatpush2.bf16.msra.mxu0 0
        %319 = vmatprep.mubr.bf16.mxu0 0
        %320 = vmatmul.mubr.bf16.gmra.mxu0 %v285
        %v321 = vpop.f32.mrf.mxu0
        %v322 = vadd.f32 0.0, %v321
        %v323 = vpop.f32.mrf.mxu0
        %v324 = vpop.f32.mrf.mxu0
        %v325 = vadd.f32 0.0, %v324
        %v326 = vpop.f32.mrf.mxu0
        %327 = vdwg.mxu0
        %v328 = vld [vmem:[#allocation2] sm:$0xff]
        %v329 = vld [vmem:[#allocation2 + $0x8] sm:$0xff]
        %v330 = vld [vmem:[%s224] sm:$0x1]
        %v332 = vlaneseq
        %v333 = vshrl.u32 %v332, 7
        %v334 = vsub.s32 0, %v333
        %v335 = vrot.slane %v330, %v334
        %v337 = vmul.f32 %v322, %v335
        %v338 = vmul.f32 %v325, %v335
        %v339 = vadd.f32 %v328, %v337
        %v340 = vadd.f32 %v329, %v338
        %341 = vst [vmem:[#allocation2] sm:$0xff] %v339
        %342 = vst [vmem:[#allocation2 + $0x8] sm:$0xff] %v340
        %p343 = scmp.eq.s32.totalorder %s26, 6
        // Predicated region
        $region49: #{tpu_custom_call.1} parent=31 // pred_check
          %p344 = pneg %p343
        $region50: #{tpu_custom_call.1} parent=31 // pred_check_branch
          %346 = sbr.rel (%p344) target = $region52
        $region51: #{tpu_custom_call.1} parent=31 // pred_region
          %v347 = vld [vmem:[#allocation2] sm:$0xff]
          %v348 = vld [vmem:[#allocation2 + $0x8] sm:$0xff]
          %v349 = vmax.f32 %v347, 0.0
          %v350 = vmax.f32 %v348, 0.0
          %v351 = vpack.c.bf16 %v350, %v349
          %v353 = vunpack.c.l.b16 %v351
          %v354 = vunpack.c.h.b16 %v351
          %v355 = vpack.c.b16 %v353, %v353
          %v356 = vpack.c.b16 %v354, %v354
          %359 = vst [vmem:[%s250] sm:$0xf] %v355
          %360 = vst [vmem:[%s250 + $0x4] sm:$0xf] %v356
        $region52: #{tpu_custom_call.1} parent=31 // pred_fallthru
          _
        %s361 = sand.u32 %s116, 1
        %s362 = scalar_lea.sflag [#allocation5], %s361
        %s363 = sand.u32 %s116, 1
        %s364 = smul.addr %s363, 8
        %s365 = scalar_lea.vmem [#allocation9], %s364
        // Predicated region
        $region53: #{tpu_custom_call.1} parent=31 // pred_check
          %p366 = pneg %p126
        $region54: #{tpu_custom_call.1} parent=31 // pred_check_branch
          %368 = sbr.rel (%p366) target = $region56
        $region55: #{tpu_custom_call.1} parent=31 // pred_region
          %s369 = smul.u32 2, %s25
          %s371 = ssub.s32 128, 128
          %372 = vsyncadd %s362, %s371
          %s373 = smul.addr %s369, 64
          %s374 = scalar_lea.hbm %s3, %s373
          %s375 = sshll.u32 %s365, 4
          %s376 = int_to_ptr.vmem [resolvable:$true] %s375
          %381 = dma.vmem_to_hbm [thread:$0]  %s376, 128, %s374, %s362, 64, 64, 4
        $region56: #{tpu_custom_call.1} parent=31 // pred_fallthru
          _
      $region32: #{tpu_custom_call.1} parent=5 // pred_fallthru
        _
      %p382 = scmp.le.s32.totalorder 2, %s16
      // Predicated region
      $region57: #{tpu_custom_call.1} parent=5 // pred_check
        %p383 = pneg %p382
      $region58: #{tpu_custom_call.1} parent=5 // pred_check_branch
        %385 = sbr.rel (%p383) target = $region60
      $region59: #{tpu_custom_call.1} parent=5 // pred_region
        %s386 = ssub.s32 %s16, 2
        // Predicated region
        $region61: #{tpu_custom_call.1} parent=59 // pred_check
          %p387 = pneg %p132
        $region62: #{tpu_custom_call.1} parent=59 // pred_check_branch
          %389 = sbr.rel (%p387) target = $region64
        $region63: #{tpu_custom_call.1} parent=59 // pred_region
          %s390 = sand.u32 %s117, 1
          %s391 = scalar_lea.sflag [#allocation5], %s390
          %s392 = sand.u32 %s117, 1
          %s393 = smul.addr %s392, 8
          %s394 = scalar_lea.vmem [#allocation9], %s393
          %395 = dma.done %s391, 128
        $region64: #{tpu_custom_call.1} parent=59 // pred_fallthru
          _
      $region60: #{tpu_custom_call.1} parent=5 // pred_fallthru
        _
    $region6: #{tpu_custom_call.1} parent=1 // loop_footer
      %s20 = sadd.s32 1, %s16
    $region7: #{tpu_custom_call.1} parent=1 // loop_footer_branch
      %15 = sbr.rel target = $region3
    $region8: #{tpu_custom_call.1} parent=1 // loop_exit
      _
    %396 = vsyncpa [#allocation4], 1
    %s397 = scalar_lea.sflag [#allocation4], 1
    %398 = vsyncpa %s397, 1
    %399 = vsyncpa [#allocation7], 1
    %400 = vsyncpa [#allocation5], 1
    %s401 = scalar_lea.sflag [#allocation5], 1
    %402 = vsyncpa %s401, 1

</llo_original>
